<compile_context>
chip_gen: v5e
topology: v5e:2x2
jax: 0.10.0
libtpu: 0.0.40
codegen_flags: <defaults>
</compile_context>

<pallas_src>
import functools

import jax
import jax.numpy as jnp
from jax.experimental import pallas as pl
from jax.experimental.pallas import tpu as pltpu

NEG_SLOPE = 0.01   # nn.LeakyReLU default negative_slope
BN_EPS = 1e-5      # nn.BatchNorm2d default eps

_VMEM_SPEC = pl.BlockSpec(memory_space=pltpu.MemorySpace.VMEM)


def _vmem_limit_bytes() -> int:
    """Per-generation VMEM budget (v7x: 64 MiB physical -> 48; v5e/v6e: 128 -> 104)."""
    cap = None
    try:
        info = pltpu.get_tpu_info()
        for name in ("vmem_capacity_bytes", "vmem_bytes", "vmem_size_bytes"):
            cap = getattr(info, name, None)
            if cap:
                break
    except Exception:
        cap = None
    if not cap:
        return 48 * 1024 * 1024                 # safe everywhere
    if cap <= 64 * 1024 * 1024:                 # v7x class
        return 48 * 1024 * 1024
    return 104 * 1024 * 1024                    # v5e / v6e class


def _check_vmem_budget(p, cmax, c_in, out_c, vmem_limit):
    # Rough peak live set of the whole-array fused stack:
    #   y + d (f32, cmax x P) + two bf16 (cmax x P) carries + feat0/out f32 (double-buffered I/O)
    approx = p * (2 * cmax * 4 + 2 * cmax * 2 + 2 * c_in * 4 + 2 * out_c * 4) + (2 << 20)
    if approx > vmem_limit:
        raise ValueError(
            f"fused PointWiseGenerator kernel needs ~{approx / 2**20:.1f} MiB VMEM "
            f"(> budget {vmem_limit / 2**20:.1f} MiB) for P={p} pixels; "
            "implement the P-tiled two-pass BN (see TODO) for images this large.")


# ----------------------------------------------------------------------------
# preprocess kernel: reflection pad (folded in, edge-slice arithmetic) +
# separable 3x3 average pool, channels-major (C, N, H, W) layout.
# ----------------------------------------------------------------------------
def _pool3x3_reflect_kernel(x_ref, o_ref, hs_ref):
    c, n, h, w = x_ref.shape
    x = x_ref[...]                                                     # (C, N, H, W) f32
    # horizontal 3-tap with reflect pad, assembled into scratch (lane axis = W)
    hs_ref[:, :, :, 1:w - 1] = x[:, :, :, 0:w - 2] + x[:, :, :, 1:w - 1] + x[:, :, :, 2:w]
    hs_ref[:, :, :, 0:1] = x[:, :, :, 0:1] + 2.0 * x[:, :, :, 1:2]
    hs_ref[:, :, :, w - 1:w] = x[:, :, :, w - 1:w] + 2.0 * x[:, :, :, w - 2:w - 1]
    hs = hs_ref[...]
    scale = 1.0 / 9.0
    # vertical 3-tap with reflect pad, written directly into the output row bands
    o_ref[:, :, 1:h - 1, :] = (hs[:, :, 0:h - 2, :] + hs[:, :, 1:h - 1, :]
                               + hs[:, :, 2:h, :]) * scale
    o_ref[:, :, 0:1, :] = (hs[:, :, 0:1, :] + 2.0 * hs[:, :, 1:2, :]) * scale
    o_ref[:, :, h - 1:h, :] = (hs[:, :, h - 1:h, :] + 2.0 * hs[:, :, h - 2:h - 1, :]) * scale


# ----------------------------------------------------------------------------
# Fused stack kernel: 6 x PointWiseBlock + postprocess 1x1 conv, operating on a
# VMEM-resident activation (channels on sublanes, P = N*H*W pixels on lanes).
#   PointWiseBlock = (1x1 conv -> BN(train) -> LeakyReLU) x 2  [+ skip]
# bf16 is used only for the dot operands and the carried activation; all BN
# statistics / elementwise math are f32.
# ----------------------------------------------------------------------------
def _fused_stack_kernel(feat_ref, w_ref, g_ref, b_ref, pb_ref, o_ref, *, dims, use_skips):
    h = feat_ref[...].astype(jnp.bfloat16)                 # (C0, P) bf16 carry

    def conv_bn_act(hin, li):
        cout, cin = dims[li]
        w = w_ref[li, :cout, :cin]                                     # bf16 (cout, cin)
        # 1x1 conv == (cout,cin) @ (cin,P) bf16 matmul on the MXU, f32 accumulation.
        y = jnp.dot(w, hin, preferred_element_type=jnp.float32)        # (cout, P) f32
        # BatchNorm2d training mode: two-pass batch moments over all N*H*W pixels (f32).
        mu = jnp.mean(y, axis=1, keepdims=True)                        # (cout, 1)
        d = y - mu
        var = jnp.mean(d * d, axis=1, keepdims=True)
        s = g_ref[li, :cout, :] * jax.lax.rsqrt(var + BN_EPS)          # (cout, 1)
        z = d * s + b_ref[li, :cout, :]
        # LeakyReLU as a single max (compare+select folded away)
        return jnp.maximum(z, NEG_SLOPE * z)

    li = 0
    for use_skip in use_skips:
        z1 = conv_bn_act(h, li)
        z2 = conv_bn_act(z1.astype(jnp.bfloat16), li + 1)
        hb = z2.astype(jnp.bfloat16)
        h = hb + h if use_skip else hb
        li += 2

    # postprocess: plain 1x1 conv (bias kept — no BN after it); lane-dense f32 output.
    cpo, cpi = dims[li]
    o_ref[...] = (jnp.dot(w_ref[li, :cpo, :cpi], h, preferred_element_type=jnp.float32)
                  + pb_ref[...])


# ----------------------------------------------------------------------------
# Parameter packing: one bf16 weight slab + f32 gamma/beta slabs (+ post bias).
# Conv biases b1/b2 are intentionally NOT packed: they are exactly cancelled by
# the BN batch-mean subtraction (training mode).
# ----------------------------------------------------------------------------
def _pack_params(params):
    convs = []
    use_skips = []
    for blk in params["blocks"]:
        convs.append((blk["w1"], blk["g1"], blk["be1"]))
        convs.append((blk["w2"], blk["g2"], blk["be2"]))
        use_skips.append(bool(blk["use_skip"]))
    convs.append((params["w_post"], None, None))

    dims = tuple((int(w.shape[0]), int(w.shape[1])) for (w, _, _) in convs)
    cmax = max(max(co, ci) for co, ci in dims)
    n_conv = len(convs)

    w_slab = jnp.zeros((n_conv, cmax, cmax), jnp.float32)
    g_slab = jnp.zeros((n_conv - 1, cmax, 1), jnp.float32)
    b_slab = jnp.zeros((n_conv - 1, cmax, 1), jnp.float32)
    for i, (wgt, g, be) in enumerate(convs):
        co, ci = dims[i]
        w_slab = w_slab.at[i, :co, :ci].set(wgt)
        if g is not None:
            g_slab = g_slab.at[i, :co, 0].set(g)
            b_slab = b_slab.at[i, :co, 0].set(be)
    w_slab = w_slab.astype(jnp.bfloat16)                   # pre-cast for the MXU
    post_b = params["b_post"].reshape(dims[-1][0], 1).astype(jnp.float32)
    return w_slab, g_slab, b_slab, post_b, dims, tuple(use_skips)


# ----------------------------------------------------------------------------
# Full forward
# ----------------------------------------------------------------------------
def pointwise_generator_forward(x, params):
    n, c_in, hh, ww = x.shape
    assert hh >= 3 and ww >= 3, "ReflectionPad2d(1) + 3x3 pool needs H,W >= 3"
    p = n * hh * ww

    vmem_limit = _vmem_limit_bytes()
    cparams = pltpu.CompilerParams(vmem_limit_bytes=vmem_limit)

    w_slab, g_slab, b_slab, post_b, dims, use_skips = _pack_params(params)
    cmax = w_slab.shape[1]
    out_c = dims[-1][0]
    _check_vmem_budget(p, cmax, c_in, out_c, vmem_limit)

    # preprocess: fused reflect-pad + separable 3x3 avg pool, channels-major so the
    # pooled result feeds the stack with a free (metadata-only) HBM reshape.
    x_t = jnp.transpose(x, (1, 0, 2, 3))                               # (C_in, N, H, W)
    pooled = pl.pallas_call(
        _pool3x3_reflect_kernel,
        out_shape=jax.ShapeDtypeStruct((c_in, n, hh, ww), jnp.float32),
        in_specs=[_VMEM_SPEC],
        out_specs=_VMEM_SPEC,
        scratch_shapes=[pltpu.VMEM((c_in, n, hh, ww), jnp.float32)],
        compiler_params=cparams,
    )(x_t)
    feat0 = pooled.reshape(c_in, p)                                    # free row-major merge

    # fused block stack + postprocess (single pallas_call, activation VMEM-resident)
    out_cp = pl.pallas_call(
        functools.partial(_fused_stack_kernel, dims=dims, use_skips=use_skips),
        out_shape=jax.ShapeDtypeStruct((out_c, p), jnp.float32),
        in_specs=[_VMEM_SPEC] * 5,
        out_specs=_VMEM_SPEC,
        compiler_params=cparams,
    )(feat0, w_slab, g_slab, b_slab, post_b)

    # back to NCHW: free reshape + tiny transpose of the (out_c<=3)-channel output
    return jnp.transpose(out_cp.reshape(out_c, n, hh, ww), (1, 0, 2, 3))


# ----------------------------------------------------------------------------
# Deterministic synthetic parameters (shapes match PointWiseGenerator.__init__;
# conv weights stored PyTorch-style as [cout, cin] = Conv2d.weight[:, :, 0, 0]).
# ----------------------------------------------------------------------------
def init_params(key, input_nc, output_nc, n_layers_G=6, ngf=32):
    in_channels = [input_nc, ngf // 2] + [ngf] * (n_layers_G - 2)
    out_channels = [ngf // 2] + [ngf] * (n_layers_G - 2) + [ngf // 2]
    blocks = []
    for cin, cout in zip(in_channels, out_channels):
        key, k1, k2, k3, k4 = jax.random.split(key, 5)
        blocks.append(dict(
            w1=0.2 * jax.random.normal(k1, (cout, cin), jnp.float32),
            b1=0.1 * jax.random.normal(k2, (cout,), jnp.float32),
            g1=jnp.ones((cout,), jnp.float32),     # BN gamma (default init = 1)
            be1=jnp.zeros((cout,), jnp.float32),   # BN beta  (default init = 0)
            w2=0.2 * jax.random.normal(k3, (cout, cout), jnp.float32),
            b2=0.1 * jax.random.normal(k4, (cout,), jnp.float32),
            g2=jnp.ones((cout,), jnp.float32),
            be2=jnp.zeros((cout,), jnp.float32),
            use_skip=(cin == cout),
        ))
    key, k1, k2 = jax.random.split(key, 3)
    return dict(
        blocks=blocks,
        w_post=0.2 * jax.random.normal(k1, (output_nc, ngf // 2), jnp.float32),
        b_post=0.1 * jax.random.normal(k2, (output_nc,), jnp.float32),
    )


# ----------------------------------------------------------------------------
# Pure-JAX f32 reference (full PyTorch semantics incl. conv biases before BN —
# the kernel drops them since training-mode BN cancels them exactly).
# ----------------------------------------------------------------------------
def reference_forward(x, params):
    xp = jnp.pad(x, ((0, 0), (0, 0), (1, 1), (1, 1)), mode="reflect")
    n, c, h, w = x.shape
    pooled = sum(xp[:, :, di:di + h, dj:dj + w]
                 for di in range(3) for dj in range(3)) / 9.0
    feat = jnp.transpose(pooled, (0, 2, 3, 1)).reshape(n * h * w, c)

    def cba(y, wgt, b, g, be):
        y = y @ wgt.T + b[None, :]
        mu = y.mean(0, keepdims=True)
        var = ((y - mu) ** 2).mean(0, keepdims=True)
        y = (y - mu) / jnp.sqrt(var + BN_EPS) * g[None, :] + be[None, :]
        return jnp.where(y >= 0, y, NEG_SLOPE * y)

    for blk in params["blocks"]:
        h2 = cba(feat, blk["w1"], blk["b1"], blk["g1"], blk["be1"])
        h2 = cba(h2, blk["w2"], blk["b2"], blk["g2"], blk["be2"])
        feat = h2 + feat if blk["use_skip"] else h2
    feat = feat @ params["w_post"].T + params["b_post"][None, :]
    out_c = params["w_post"].shape[0]
    return jnp.transpose(feat.reshape(n, h, w, out_c), (0, 3, 1, 2))


if __name__ == "__main__":
    key = jax.random.PRNGKey(0)
    key, kx, kp = jax.random.split(key, 3)

    # small shapes consistent with the module: N=2, input_nc=4, H=W=16, output_nc=3
    N, INPUT_NC, OUTPUT_NC, H, W = 2, 4, 3, 16, 16
    x = jax.random.normal(kx, (N, INPUT_NC, H, W), jnp.float32)
    params = init_params(kp, INPUT_NC, OUTPUT_NC, n_layers_G=6, ngf=32)

    out = jax.block_until_ready(pointwise_generator_forward(x, params))
    assert out.shape == (N, OUTPUT_NC, H, W), out.shape

    ref = jax.block_until_ready(reference_forward(x, params))
    # bf16 MXU operands (per perf review) set the error floor vs the all-f32 reference,
    # so validate with a relative-L2 + loose max-abs check instead of tight allclose.
    rel_l2 = float(jnp.linalg.norm(out - ref) / jnp.linalg.norm(ref))
    max_abs = float(jnp.max(jnp.abs(out - ref)))
    assert rel_l2 < 5e-2, (rel_l2, max_abs)
    assert max_abs < 1e-1, (rel_l2, max_abs)

    print("KERNEL_OK")
</pallas_src>

<mosaic_0001>
module attributes {stable_mosaic.version = 11 : i64} {
  func.func @_pool3x3_reflect_kernel(%arg0: memref<4x2x16x16xf32, #tpu.memory_space<vmem>>, %arg1: memref<4x2x16x16xf32, #tpu.memory_space<vmem>>, %arg2: memref<4x2x16x16xf32, #tpu.memory_space<vmem>>) attributes {dimension_semantics = [], scalar_prefetch = 0 : i64, scratch_operands = 1 : i64, tpu.core_type = #tpu.core_type<tc>} {
    %c0 = arith.constant 0 : index
    %c0_0 = arith.constant 0 : index
    %c0_1 = arith.constant 0 : index
    %c0_2 = arith.constant 0 : index
    %0 = vector.load %arg0[%c0, %c0_0, %c0_1, %c0_2] : memref<4x2x16x16xf32, #tpu.memory_space<vmem>>, vector<4x2x16x16xf32>
    %1 = vector.extract_strided_slice %0 {offsets = [0, 0, 0, 0], sizes = [4, 2, 16, 14], strides = [1, 1, 1, 1]} : vector<4x2x16x16xf32> to vector<4x2x16x14xf32>
    %2 = vector.extract_strided_slice %0 {offsets = [0, 0, 0, 1], sizes = [4, 2, 16, 14], strides = [1, 1, 1, 1]} : vector<4x2x16x16xf32> to vector<4x2x16x14xf32>
    %3 = arith.addf %1, %2 : vector<4x2x16x14xf32>
    %4 = vector.extract_strided_slice %0 {offsets = [0, 0, 0, 2], sizes = [4, 2, 16, 14], strides = [1, 1, 1, 1]} : vector<4x2x16x16xf32> to vector<4x2x16x14xf32>
    %5 = arith.addf %3, %4 : vector<4x2x16x14xf32>
    %c0_3 = arith.constant 0 : index
    %c0_4 = arith.constant 0 : index
    %c0_5 = arith.constant 0 : index
    %c1 = arith.constant 1 : index
    %6 = vector.load %arg2[%c0_3, %c0_4, %c0_5, %c1] : memref<4x2x16x16xf32, #tpu.memory_space<vmem>>, vector<4x2x16x14xf32>
    tpu.vector_store %arg2[%c0_3, %c0_4, %c0_5, %c1], %5 {strides = array<i32>} : memref<4x2x16x16xf32, #tpu.memory_space<vmem>>, vector<4x2x16x14xf32>,
    %7 = vector.extract_strided_slice %0 {offsets = [0, 0, 0, 0], sizes = [4, 2, 16, 1], strides = [1, 1, 1, 1]} : vector<4x2x16x16xf32> to vector<4x2x16x1xf32>
    %8 = vector.extract_strided_slice %0 {offsets = [0, 0, 0, 1], sizes = [4, 2, 16, 1], strides = [1, 1, 1, 1]} : vector<4x2x16x16xf32> to vector<4x2x16x1xf32>
    %cst = arith.constant 2.000000e+00 : f32
    %9 = vector.broadcast %cst : f32 to vector<4x2x16x1xf32>
    %10 = arith.mulf %9, %8 : vector<4x2x16x1xf32>
    %11 = arith.addf %7, %10 : vector<4x2x16x1xf32>
    %c0_6 = arith.constant 0 : index
    %c0_7 = arith.constant 0 : index
    %c0_8 = arith.constant 0 : index
    %c0_9 = arith.constant 0 : index
    %12 = vector.load %arg2[%c0_6, %c0_7, %c0_8, %c0_9] : memref<4x2x16x16xf32, #tpu.memory_space<vmem>>, vector<4x2x16x1xf32>
    tpu.vector_store %arg2[%c0_6, %c0_7, %c0_8, %c0_9], %11 {strides = array<i32>} : memref<4x2x16x16xf32, #tpu.memory_space<vmem>>, vector<4x2x16x1xf32>,
    %13 = vector.extract_strided_slice %0 {offsets = [0, 0, 0, 15], sizes = [4, 2, 16, 1], strides = [1, 1, 1, 1]} : vector<4x2x16x16xf32> to vector<4x2x16x1xf32>
    %14 = vector.extract_strided_slice %0 {offsets = [0, 0, 0, 14], sizes = [4, 2, 16, 1], strides = [1, 1, 1, 1]} : vector<4x2x16x16xf32> to vector<4x2x16x1xf32>
    %cst_10 = arith.constant 2.000000e+00 : f32
    %15 = vector.broadcast %cst_10 : f32 to vector<4x2x16x1xf32>
    %16 = arith.mulf %15, %14 : vector<4x2x16x1xf32>
    %17 = arith.addf %13, %16 : vector<4x2x16x1xf32>
    %c0_11 = arith.constant 0 : index
    %c0_12 = arith.constant 0 : index
    %c0_13 = arith.constant 0 : index
    %c15 = arith.constant 15 : index
    %18 = vector.load %arg2[%c0_11, %c0_12, %c0_13, %c15] : memref<4x2x16x16xf32, #tpu.memory_space<vmem>>, vector<4x2x16x1xf32>
    tpu.vector_store %arg2[%c0_11, %c0_12, %c0_13, %c15], %17 {strides = array<i32>} : memref<4x2x16x16xf32, #tpu.memory_space<vmem>>, vector<4x2x16x1xf32>,
    %c0_14 = arith.constant 0 : index
    %c0_15 = arith.constant 0 : index
    %c0_16 = arith.constant 0 : index
    %c0_17 = arith.constant 0 : index
    %19 = vector.load %arg2[%c0_14, %c0_15, %c0_16, %c0_17] : memref<4x2x16x16xf32, #tpu.memory_space<vmem>>, vector<4x2x16x16xf32>
    %20 = vector.extract_strided_slice %19 {offsets = [0, 0, 0, 0], sizes = [4, 2, 14, 16], strides = [1, 1, 1, 1]} : vector<4x2x16x16xf32> to vector<4x2x14x16xf32>
    %21 = vector.extract_strided_slice %19 {offsets = [0, 0, 1, 0], sizes = [4, 2, 14, 16], strides = [1, 1, 1, 1]} : vector<4x2x16x16xf32> to vector<4x2x14x16xf32>
    %22 = arith.addf %20, %21 : vector<4x2x14x16xf32>
    %23 = vector.extract_strided_slice %19 {offsets = [0, 0, 2, 0], sizes = [4, 2, 14, 16], strides = [1, 1, 1, 1]} : vector<4x2x16x16xf32> to vector<4x2x14x16xf32>
    %24 = arith.addf %22, %23 : vector<4x2x14x16xf32>
    %cst_18 = arith.constant 0.111111112 : f32
    %25 = vector.broadcast %cst_18 : f32 to vector<4x2x14x16xf32>
    %26 = arith.mulf %24, %25 : vector<4x2x14x16xf32>
    %c0_19 = arith.constant 0 : index
    %c0_20 = arith.constant 0 : index
    %c1_21 = arith.constant 1 : index
    %c0_22 = arith.constant 0 : index
    %27 = vector.load %arg1[%c0_19, %c0_20, %c1_21, %c0_22] : memref<4x2x16x16xf32, #tpu.memory_space<vmem>>, vector<4x2x14x16xf32>
    tpu.vector_store %arg1[%c0_19, %c0_20, %c1_21, %c0_22], %26 {strides = array<i32>} : memref<4x2x16x16xf32, #tpu.memory_space<vmem>>, vector<4x2x14x16xf32>,
    %28 = vector.extract_strided_slice %19 {offsets = [0, 0, 0, 0], sizes = [4, 2, 1, 16], strides = [1, 1, 1, 1]} : vector<4x2x16x16xf32> to vector<4x2x1x16xf32>
    %29 = vector.extract_strided_slice %19 {offsets = [0, 0, 1, 0], sizes = [4, 2, 1, 16], strides = [1, 1, 1, 1]} : vector<4x2x16x16xf32> to vector<4x2x1x16xf32>
    %cst_23 = arith.constant 2.000000e+00 : f32
    %30 = vector.broadcast %cst_23 : f32 to vector<4x2x1x16xf32>
    %31 = arith.mulf %30, %29 : vector<4x2x1x16xf32>
    %32 = arith.addf %28, %31 : vector<4x2x1x16xf32>
    %cst_24 = arith.constant 0.111111112 : f32
    %33 = vector.broadcast %cst_24 : f32 to vector<4x2x1x16xf32>
    %34 = arith.mulf %32, %33 : vector<4x2x1x16xf32>
    %c0_25 = arith.constant 0 : index
    %c0_26 = arith.constant 0 : index
    %c0_27 = arith.constant 0 : index
    %c0_28 = arith.constant 0 : index
    %35 = vector.load %arg1[%c0_25, %c0_26, %c0_27, %c0_28] : memref<4x2x16x16xf32, #tpu.memory_space<vmem>>, vector<4x2x1x16xf32>
    tpu.vector_store %arg1[%c0_25, %c0_26, %c0_27, %c0_28], %34 {strides = array<i32>} : memref<4x2x16x16xf32, #tpu.memory_space<vmem>>, vector<4x2x1x16xf32>,
    %36 = vector.extract_strided_slice %19 {offsets = [0, 0, 15, 0], sizes = [4, 2, 1, 16], strides = [1, 1, 1, 1]} : vector<4x2x16x16xf32> to vector<4x2x1x16xf32>
    %37 = vector.extract_strided_slice %19 {offsets = [0, 0, 14, 0], sizes = [4, 2, 1, 16], strides = [1, 1, 1, 1]} : vector<4x2x16x16xf32> to vector<4x2x1x16xf32>
    %cst_29 = arith.constant 2.000000e+00 : f32
    %38 = vector.broadcast %cst_29 : f32 to vector<4x2x1x16xf32>
    %39 = arith.mulf %38, %37 : vector<4x2x1x16xf32>
    %40 = arith.addf %36, %39 : vector<4x2x1x16xf32>
    %cst_30 = arith.constant 0.111111112 : f32
    %41 = vector.broadcast %cst_30 : f32 to vector<4x2x1x16xf32>
    %42 = arith.mulf %40, %41 : vector<4x2x1x16xf32>
    %c0_31 = arith.constant 0 : index
    %c0_32 = arith.constant 0 : index
    %c15_33 = arith.constant 15 : index
    %c0_34 = arith.constant 0 : index
    %43 = vector.load %arg1[%c0_31, %c0_32, %c15_33, %c0_34] : memref<4x2x16x16xf32, #tpu.memory_space<vmem>>, vector<4x2x1x16xf32>
    tpu.vector_store %arg1[%c0_31, %c0_32, %c15_33, %c0_34], %42 {strides = array<i32>} : memref<4x2x16x16xf32, #tpu.memory_space<vmem>>, vector<4x2x1x16xf32>,
    return
  }
}

</mosaic_0001>

<llo_original>
// kernel: tpu_custom_call.1
$region0: #{tpu_custom_call.1}
  #allocation0 [shape = 'u32[]', space=smem, size = 0x4, offset = 0x4, fixed_abs, tag = 'smem constant byte address 0x4 - core index']
  #allocation1 [shape = 'u32[72,128]{1,0:T(1,128)}', space=vmem, size = 0x9000, scoped, tag = 'internal scratch']
  #allocation2 [shape = 'f32[4,2,16,16]{3,2,1,0:T(8,128)}', space=vmem, size = 0x10000, scoped, tag = 'scratch operand']
  %s0 = inlined_call_operand.hbm [shape: f32[4,2,16,16], index: 0, kind: input, shape index: {}]
  %s1 = inlined_call_operand.hbm [shape: f32[4,2,16,16], index: 1, kind: output, shape index: {}]
  %s2 = sld [smem:[#allocation0]]
  $region18: #{tpu_custom_call.1} parent=0
    _
  %s4 = ssub.s32 1, %s2
  %s5 = scalar_select 0, %s4, %s2
  $region1: #{tpu_custom_call.1} parent=0
    #allocation3 [shape = 'u8[65536]{0}', space=vmem, size = 0x10000, scoped, tag = 'input window, operand 0, single buffered']
    #allocation4 [shape = 's32[1]{0}', space=sflag, size = 0x4, scoped, tag = 'scoped memory for tpu_custom_call.1']
    #allocation5 [shape = 's32[1]{0}', space=sflag, size = 0x4, scoped, tag = 'scoped memory for tpu_custom_call.1']
    #allocation6 [shape = 'u8[65536]{0}', space=vmem, size = 0x10000, scoped, tag = 'output window, operand 0, single buffered']
    %6 = vsyncpa [#allocation4], 0
    %7 = vsyncpa [#allocation5], 0
    // Predicated region
    $region2: #{tpu_custom_call.1} parent=1 // pred_check
      _
    $region3: #{tpu_custom_call.1} parent=1 // pred_check_branch
      %9 = sbr.rel (0) target = $region5
    $region4: #{tpu_custom_call.1} parent=1 // pred_region
      %11 = vsyncadd [#allocation4], 0
      %s12 = sshll.u32 %s0, 4
      %s13 = int_to_ptr.hbm [resolvable:$true] %s12
      %s14 = sshll.u32 [#allocation3], 4
      %s15 = int_to_ptr.vmem [resolvable:$true] %s14
      %20 = dma.hbm_to_vmem [thread:$0]  %s13, 2048, %s15, [#allocation4], 128, 128, 8
    $region5: #{tpu_custom_call.1} parent=1 // pred_fallthru
      _
    // Predicated region
    $region6: #{tpu_custom_call.1} parent=1 // pred_check
      _
    $region7: #{tpu_custom_call.1} parent=1 // pred_check_branch
      %22 = sbr.rel (0) target = $region9
    $region8: #{tpu_custom_call.1} parent=1 // pred_region
      %24 = dma.done [#allocation4], 2048
    $region9: #{tpu_custom_call.1} parent=1 // pred_fallthru
      _
    %v25 = vld [vmem:[#allocation3] sm:$0xff]
    %v26 = vld [vmem:[#allocation3 + $0x8] sm:$0xff]
    %v27 = vld [vmem:[#allocation3 + $0x10] sm:$0xff]
    %v28 = vld [vmem:[#allocation3 + $0x18] sm:$0xff]
    %v29 = vld [vmem:[#allocation3 + $0x20] sm:$0xff]
    %v30 = vld [vmem:[#allocation3 + $0x28] sm:$0xff]
    %v31 = vld [vmem:[#allocation3 + $0x30] sm:$0xff]
    %v32 = vld [vmem:[#allocation3 + $0x38] sm:$0xff]
    %v33 = vld [vmem:[#allocation3 + $0x40] sm:$0xff]
    %v34 = vld [vmem:[#allocation3 + $0x48] sm:$0xff]
    %v35 = vld [vmem:[#allocation3 + $0x50] sm:$0xff]
    %v36 = vld [vmem:[#allocation3 + $0x58] sm:$0xff]
    %v37 = vld [vmem:[#allocation3 + $0x60] sm:$0xff]
    %v38 = vld [vmem:[#allocation3 + $0x68] sm:$0xff]
    %v39 = vld [vmem:[#allocation3 + $0x70] sm:$0xff]
    %v40 = vld [vmem:[#allocation3 + $0x78] sm:$0xff]
    %57 = vrot.lane.b32.xlu0 %v25, 127
    %v58 = vpop.permute.xlu0 %57
    %59 = vrot.lane.b32.xlu0 %v26, 127
    %v60 = vpop.permute.xlu0 %59
    %61 = vrot.lane.b32.xlu0 %v27, 127
    %v62 = vpop.permute.xlu0 %61
    %63 = vrot.lane.b32.xlu0 %v28, 127
    %v64 = vpop.permute.xlu0 %63
    %65 = vrot.lane.b32.xlu0 %v29, 127
    %v66 = vpop.permute.xlu0 %65
    %67 = vrot.lane.b32.xlu0 %v30, 127
    %v68 = vpop.permute.xlu0 %67
    %69 = vrot.lane.b32.xlu0 %v31, 127
    %v70 = vpop.permute.xlu0 %69
    %71 = vrot.lane.b32.xlu0 %v32, 127
    %v72 = vpop.permute.xlu0 %71
    %73 = vrot.lane.b32.xlu0 %v33, 127
    %v74 = vpop.permute.xlu0 %73
    %75 = vrot.lane.b32.xlu0 %v34, 127
    %v76 = vpop.permute.xlu0 %75
    %77 = vrot.lane.b32.xlu0 %v35, 127
    %v78 = vpop.permute.xlu0 %77
    %79 = vrot.lane.b32.xlu0 %v36, 127
    %v80 = vpop.permute.xlu0 %79
    %81 = vrot.lane.b32.xlu0 %v37, 127
    %v82 = vpop.permute.xlu0 %81
    %83 = vrot.lane.b32.xlu0 %v38, 127
    %v84 = vpop.permute.xlu0 %83
    %85 = vrot.lane.b32.xlu0 %v39, 127
    %v86 = vpop.permute.xlu0 %85
    %87 = vrot.lane.b32.xlu0 %v40, 127
    %v88 = vpop.permute.xlu0 %87
    %v105 = vadd.f32 %v25, %v58
    %v106 = vadd.f32 %v26, %v60
    %v107 = vadd.f32 %v27, %v62
    %v108 = vadd.f32 %v28, %v64
    %v109 = vadd.f32 %v29, %v66
    %v110 = vadd.f32 %v30, %v68
    %v111 = vadd.f32 %v31, %v70
    %v112 = vadd.f32 %v32, %v72
    %v113 = vadd.f32 %v33, %v74
    %v114 = vadd.f32 %v34, %v76
    %v115 = vadd.f32 %v35, %v78
    %v116 = vadd.f32 %v36, %v80
    %v117 = vadd.f32 %v37, %v82
    %v118 = vadd.f32 %v38, %v84
    %v119 = vadd.f32 %v39, %v86
    %v120 = vadd.f32 %v40, %v88
    %121 = vrot.lane.b32.xlu0 %v25, 126
    %v122 = vpop.permute.xlu0 %121
    %123 = vrot.lane.b32.xlu0 %v26, 126
    %v124 = vpop.permute.xlu0 %123
    %125 = vrot.lane.b32.xlu0 %v27, 126
    %v126 = vpop.permute.xlu0 %125
    %127 = vrot.lane.b32.xlu0 %v28, 126
    %v128 = vpop.permute.xlu0 %127
    %129 = vrot.lane.b32.xlu0 %v29, 126
    %v130 = vpop.permute.xlu0 %129
    %131 = vrot.lane.b32.xlu0 %v30, 126
    %v132 = vpop.permute.xlu0 %131
    %133 = vrot.lane.b32.xlu0 %v31, 126
    %v134 = vpop.permute.xlu0 %133
    %135 = vrot.lane.b32.xlu0 %v32, 126
    %v136 = vpop.permute.xlu0 %135
    %137 = vrot.lane.b32.xlu0 %v33, 126
    %v138 = vpop.permute.xlu0 %137
    %139 = vrot.lane.b32.xlu0 %v34, 126
    %v140 = vpop.permute.xlu0 %139
    %141 = vrot.lane.b32.xlu0 %v35, 126
    %v142 = vpop.permute.xlu0 %141
    %143 = vrot.lane.b32.xlu0 %v36, 126
    %v144 = vpop.permute.xlu0 %143
    %145 = vrot.lane.b32.xlu0 %v37, 126
    %v146 = vpop.permute.xlu0 %145
    %147 = vrot.lane.b32.xlu0 %v38, 126
    %v148 = vpop.permute.xlu0 %147
    %149 = vrot.lane.b32.xlu0 %v39, 126
    %v150 = vpop.permute.xlu0 %149
    %151 = vrot.lane.b32.xlu0 %v40, 126
    %v152 = vpop.permute.xlu0 %151
    %v169 = vadd.f32 %v105, %v122
    %v170 = vadd.f32 %v106, %v124
    %v171 = vadd.f32 %v107, %v126
    %v172 = vadd.f32 %v108, %v128
    %v173 = vadd.f32 %v109, %v130
    %v174 = vadd.f32 %v110, %v132
    %v175 = vadd.f32 %v111, %v134
    %v176 = vadd.f32 %v112, %v136
    %v177 = vadd.f32 %v113, %v138
    %v178 = vadd.f32 %v114, %v140
    %v179 = vadd.f32 %v115, %v142
    %v180 = vadd.f32 %v116, %v144
    %v181 = vadd.f32 %v117, %v146
    %v182 = vadd.f32 %v118, %v148
    %v183 = vadd.f32 %v119, %v150
    %v184 = vadd.f32 %v120, %v152
    %201 = vrot.lane.b32.xlu0 %v169, 1
    %v202 = vpop.permute.xlu0 %201
    %203 = vrot.lane.b32.xlu0 %v170, 1
    %v204 = vpop.permute.xlu0 %203
    %205 = vrot.lane.b32.xlu0 %v171, 1
    %v206 = vpop.permute.xlu0 %205
    %207 = vrot.lane.b32.xlu0 %v172, 1
    %v208 = vpop.permute.xlu0 %207
    %209 = vrot.lane.b32.xlu0 %v173, 1
    %v210 = vpop.permute.xlu0 %209
    %211 = vrot.lane.b32.xlu0 %v174, 1
    %v212 = vpop.permute.xlu0 %211
    %213 = vrot.lane.b32.xlu0 %v175, 1
    %v214 = vpop.permute.xlu0 %213
    %215 = vrot.lane.b32.xlu0 %v176, 1
    %v216 = vpop.permute.xlu0 %215
    %217 = vrot.lane.b32.xlu0 %v177, 1
    %v218 = vpop.permute.xlu0 %217
    %219 = vrot.lane.b32.xlu0 %v178, 1
    %v220 = vpop.permute.xlu0 %219
    %221 = vrot.lane.b32.xlu0 %v179, 1
    %v222 = vpop.permute.xlu0 %221
    %223 = vrot.lane.b32.xlu0 %v180, 1
    %v224 = vpop.permute.xlu0 %223
    %225 = vrot.lane.b32.xlu0 %v181, 1
    %v226 = vpop.permute.xlu0 %225
    %227 = vrot.lane.b32.xlu0 %v182, 1
    %v228 = vpop.permute.xlu0 %227
    %229 = vrot.lane.b32.xlu0 %v183, 1
    %v230 = vpop.permute.xlu0 %229
    %231 = vrot.lane.b32.xlu0 %v184, 1
    %v232 = vpop.permute.xlu0 %231
    %vm249 = vcmask 121864
    %250 = vst.msk [vmem:[#allocation2] sm:$0xff] %vm249, %v202
    %251 = vst.msk [vmem:[#allocation2 + $0x8] sm:$0xff] %vm249, %v204
    %252 = vst.msk [vmem:[#allocation2 + $0x10] sm:$0xff] %vm249, %v206
    %253 = vst.msk [vmem:[#allocation2 + $0x18] sm:$0xff] %vm249, %v208
    %254 = vst.msk [vmem:[#allocation2 + $0x20] sm:$0xff] %vm249, %v210
    %255 = vst.msk [vmem:[#allocation2 + $0x28] sm:$0xff] %vm249, %v212
    %256 = vst.msk [vmem:[#allocation2 + $0x30] sm:$0xff] %vm249, %v214
    %257 = vst.msk [vmem:[#allocation2 + $0x38] sm:$0xff] %vm249, %v216
    %258 = vst.msk [vmem:[#allocation2 + $0x40] sm:$0xff] %vm249, %v218
    %259 = vst.msk [vmem:[#allocation2 + $0x48] sm:$0xff] %vm249, %v220
    %260 = vst.msk [vmem:[#allocation2 + $0x50] sm:$0xff] %vm249, %v222
    %261 = vst.msk [vmem:[#allocation2 + $0x58] sm:$0xff] %vm249, %v224
    %262 = vst.msk [vmem:[#allocation2 + $0x60] sm:$0xff] %vm249, %v226
    %263 = vst.msk [vmem:[#allocation2 + $0x68] sm:$0xff] %vm249, %v228
    %264 = vst.msk [vmem:[#allocation2 + $0x70] sm:$0xff] %vm249, %v230
    %265 = vst.msk [vmem:[#allocation2 + $0x78] sm:$0xff] %vm249, %v232
    %v266 = vmul.f32 %v25, 2.0
    %v267 = vmul.f32 %v26, 2.0
    %v268 = vmul.f32 %v27, 2.0
    %v269 = vmul.f32 %v28, 2.0
    %v270 = vmul.f32 %v29, 2.0
    %v271 = vmul.f32 %v30, 2.0
    %v272 = vmul.f32 %v31, 2.0
    %v273 = vmul.f32 %v32, 2.0
    %v274 = vmul.f32 %v33, 2.0
    %v275 = vmul.f32 %v34, 2.0
    %v276 = vmul.f32 %v35, 2.0
    %v277 = vmul.f32 %v36, 2.0
    %v278 = vmul.f32 %v37, 2.0
    %v279 = vmul.f32 %v38, 2.0
    %v280 = vmul.f32 %v39, 2.0
    %v281 = vmul.f32 %v40, 2.0
    %298 = vrot.lane.b32.xlu0 %v266, 127
    %v299 = vpop.permute.xlu0 %298
    %300 = vrot.lane.b32.xlu0 %v267, 127
    %v301 = vpop.permute.xlu0 %300
    %302 = vrot.lane.b32.xlu0 %v268, 127
    %v303 = vpop.permute.xlu0 %302
    %304 = vrot.lane.b32.xlu0 %v269, 127
    %v305 = vpop.permute.xlu0 %304
    %306 = vrot.lane.b32.xlu0 %v270, 127
    %v307 = vpop.permute.xlu0 %306
    %308 = vrot.lane.b32.xlu0 %v271, 127
    %v309 = vpop.permute.xlu0 %308
    %310 = vrot.lane.b32.xlu0 %v272, 127
    %v311 = vpop.permute.xlu0 %310
    %312 = vrot.lane.b32.xlu0 %v273, 127
    %v313 = vpop.permute.xlu0 %312
    %314 = vrot.lane.b32.xlu0 %v274, 127
    %v315 = vpop.permute.xlu0 %314
    %316 = vrot.lane.b32.xlu0 %v275, 127
    %v317 = vpop.permute.xlu0 %316
    %318 = vrot.lane.b32.xlu0 %v276, 127
    %v319 = vpop.permute.xlu0 %318
    %320 = vrot.lane.b32.xlu0 %v277, 127
    %v321 = vpop.permute.xlu0 %320
    %322 = vrot.lane.b32.xlu0 %v278, 127
    %v323 = vpop.permute.xlu0 %322
    %324 = vrot.lane.b32.xlu0 %v279, 127
    %v325 = vpop.permute.xlu0 %324
    %326 = vrot.lane.b32.xlu0 %v280, 127
    %v327 = vpop.permute.xlu0 %326
    %328 = vrot.lane.b32.xlu0 %v281, 127
    %v329 = vpop.permute.xlu0 %328
    %v346 = vadd.f32 %v25, %v299
    %v347 = vadd.f32 %v26, %v301
    %v348 = vadd.f32 %v27, %v303
    %v349 = vadd.f32 %v28, %v305
    %v350 = vadd.f32 %v29, %v307
    %v351 = vadd.f32 %v30, %v309
    %v352 = vadd.f32 %v31, %v311
    %v353 = vadd.f32 %v32, %v313
    %v354 = vadd.f32 %v33, %v315
    %v355 = vadd.f32 %v34, %v317
    %v356 = vadd.f32 %v35, %v319
    %v357 = vadd.f32 %v36, %v321
    %v358 = vadd.f32 %v37, %v323
    %v359 = vadd.f32 %v38, %v325
    %v360 = vadd.f32 %v39, %v327
    %v361 = vadd.f32 %v40, %v329
    %vm362 = vcmask 7168
    %363 = vst.msk [vmem:[#allocation2] sm:$0xff] %vm362, %v346
    %364 = vst.msk [vmem:[#allocation2 + $0x8] sm:$0xff] %vm362, %v347
    %365 = vst.msk [vmem:[#allocation2 + $0x10] sm:$0xff] %vm362, %v348
    %366 = vst.msk [vmem:[#allocation2 + $0x18] sm:$0xff] %vm362, %v349
    %367 = vst.msk [vmem:[#allocation2 + $0x20] sm:$0xff] %vm362, %v350
    %368 = vst.msk [vmem:[#allocation2 + $0x28] sm:$0xff] %vm362, %v351
    %369 = vst.msk [vmem:[#allocation2 + $0x30] sm:$0xff] %vm362, %v352
    %370 = vst.msk [vmem:[#allocation2 + $0x38] sm:$0xff] %vm362, %v353
    %371 = vst.msk [vmem:[#allocation2 + $0x40] sm:$0xff] %vm362, %v354
    %372 = vst.msk [vmem:[#allocation2 + $0x48] sm:$0xff] %vm362, %v355
    %373 = vst.msk [vmem:[#allocation2 + $0x50] sm:$0xff] %vm362, %v356
    %374 = vst.msk [vmem:[#allocation2 + $0x58] sm:$0xff] %vm362, %v357
    %375 = vst.msk [vmem:[#allocation2 + $0x60] sm:$0xff] %vm362, %v358
    %376 = vst.msk [vmem:[#allocation2 + $0x68] sm:$0xff] %vm362, %v359
    %377 = vst.msk [vmem:[#allocation2 + $0x70] sm:$0xff] %vm362, %v360
    %378 = vst.msk [vmem:[#allocation2 + $0x78] sm:$0xff] %vm362, %v361
    %379 = vrot.lane.b32.xlu0 %v266, 1
    %v380 = vpop.permute.xlu0 %379
    %381 = vrot.lane.b32.xlu0 %v267, 1
    %v382 = vpop.permute.xlu0 %381
    %383 = vrot.lane.b32.xlu0 %v268, 1
    %v384 = vpop.permute.xlu0 %383
    %385 = vrot.lane.b32.xlu0 %v269, 1
    %v386 = vpop.permute.xlu0 %385
    %387 = vrot.lane.b32.xlu0 %v270, 1
    %v388 = vpop.permute.xlu0 %387
    %389 = vrot.lane.b32.xlu0 %v271, 1
    %v390 = vpop.permute.xlu0 %389
    %391 = vrot.lane.b32.xlu0 %v272, 1
    %v392 = vpop.permute.xlu0 %391
    %393 = vrot.lane.b32.xlu0 %v273, 1
    %v394 = vpop.permute.xlu0 %393
    %395 = vrot.lane.b32.xlu0 %v274, 1
    %v396 = vpop.permute.xlu0 %395
    %397 = vrot.lane.b32.xlu0 %v275, 1
    %v398 = vpop.permute.xlu0 %397
    %399 = vrot.lane.b32.xlu0 %v276, 1
    %v400 = vpop.permute.xlu0 %399
    %401 = vrot.lane.b32.xlu0 %v277, 1
    %v402 = vpop.permute.xlu0 %401
    %403 = vrot.lane.b32.xlu0 %v278, 1
    %v404 = vpop.permute.xlu0 %403
    %405 = vrot.lane.b32.xlu0 %v279, 1
    %v406 = vpop.permute.xlu0 %405
    %407 = vrot.lane.b32.xlu0 %v280, 1
    %v408 = vpop.permute.xlu0 %407
    %409 = vrot.lane.b32.xlu0 %v281, 1
    %v410 = vpop.permute.xlu0 %409
    %v427 = vadd.f32 %v25, %v380
    %v428 = vadd.f32 %v26, %v382
    %v429 = vadd.f32 %v27, %v384
    %v430 = vadd.f32 %v28, %v386
    %v431 = vadd.f32 %v29, %v388
    %v432 = vadd.f32 %v30, %v390
    %v433 = vadd.f32 %v31, %v392
    %v434 = vadd.f32 %v32, %v394
    %v435 = vadd.f32 %v33, %v396
    %v436 = vadd.f32 %v34, %v398
    %v437 = vadd.f32 %v35, %v400
    %v438 = vadd.f32 %v36, %v402
    %v439 = vadd.f32 %v37, %v404
    %v440 = vadd.f32 %v38, %v406
    %v441 = vadd.f32 %v39, %v408
    %v442 = vadd.f32 %v40, %v410
    %vm443 = vcmask 130168
    %444 = vst.msk [vmem:[#allocation2] sm:$0xff] %vm443, %v427
    %445 = vst.msk [vmem:[#allocation2 + $0x8] sm:$0xff] %vm443, %v428
    %446 = vst.msk [vmem:[#allocation2 + $0x10] sm:$0xff] %vm443, %v429
    %447 = vst.msk [vmem:[#allocation2 + $0x18] sm:$0xff] %vm443, %v430
    %448 = vst.msk [vmem:[#allocation2 + $0x20] sm:$0xff] %vm443, %v431
    %449 = vst.msk [vmem:[#allocation2 + $0x28] sm:$0xff] %vm443, %v432
    %450 = vst.msk [vmem:[#allocation2 + $0x30] sm:$0xff] %vm443, %v433
    %451 = vst.msk [vmem:[#allocation2 + $0x38] sm:$0xff] %vm443, %v434
    %452 = vst.msk [vmem:[#allocation2 + $0x40] sm:$0xff] %vm443, %v435
    %453 = vst.msk [vmem:[#allocation2 + $0x48] sm:$0xff] %vm443, %v436
    %454 = vst.msk [vmem:[#allocation2 + $0x50] sm:$0xff] %vm443, %v437
    %455 = vst.msk [vmem:[#allocation2 + $0x58] sm:$0xff] %vm443, %v438
    %456 = vst.msk [vmem:[#allocation2 + $0x60] sm:$0xff] %vm443, %v439
    %457 = vst.msk [vmem:[#allocation2 + $0x68] sm:$0xff] %vm443, %v440
    %458 = vst.msk [vmem:[#allocation2 + $0x70] sm:$0xff] %vm443, %v441
    %459 = vst.msk [vmem:[#allocation2 + $0x78] sm:$0xff] %vm443, %v442
    %v460 = vld [vmem:[#allocation2] sm:$0xff]
    %v461 = vld [vmem:[#allocation2 + $0x8] sm:$0xff]
    %v462 = vld [vmem:[#allocation2 + $0x10] sm:$0xff]
    %v463 = vld [vmem:[#allocation2 + $0x18] sm:$0xff]
    %v464 = vld [vmem:[#allocation2 + $0x20] sm:$0xff]
    %v465 = vld [vmem:[#allocation2 + $0x28] sm:$0xff]
    %v466 = vld [vmem:[#allocation2 + $0x30] sm:$0xff]
    %v467 = vld [vmem:[#allocation2 + $0x38] sm:$0xff]
    %v468 = vld [vmem:[#allocation2 + $0x40] sm:$0xff]
    %v469 = vld [vmem:[#allocation2 + $0x48] sm:$0xff]
    %v470 = vld [vmem:[#allocation2 + $0x50] sm:$0xff]
    %v471 = vld [vmem:[#allocation2 + $0x58] sm:$0xff]
    %v472 = vld [vmem:[#allocation2 + $0x60] sm:$0xff]
    %v473 = vld [vmem:[#allocation2 + $0x68] sm:$0xff]
    %v474 = vld [vmem:[#allocation2 + $0x70] sm:$0xff]
    %v475 = vld [vmem:[#allocation2 + $0x78] sm:$0xff]
    %vm492 = vcmask 1046528
    %v493 = vrot.slane %v460, 1
    %v494 = vrot.slane %v461, 1
    %v495 = vsel %vm492, %v493, %v494
    %v496 = vrot.slane %v462, 1
    %v497 = vrot.slane %v463, 1
    %v498 = vsel %vm492, %v496, %v497
    %v499 = vrot.slane %v464, 1
    %v500 = vrot.slane %v465, 1
    %v501 = vsel %vm492, %v499, %v500
    %v502 = vrot.slane %v466, 1
    %v503 = vrot.slane %v467, 1
    %v504 = vsel %vm492, %v502, %v503
    %v505 = vrot.slane %v468, 1
    %v506 = vrot.slane %v469, 1
    %v507 = vsel %vm492, %v505, %v506
    %v508 = vrot.slane %v470, 1
    %v509 = vrot.slane %v471, 1
    %v510 = vsel %vm492, %v508, %v509
    %v511 = vrot.slane %v472, 1
    %v512 = vrot.slane %v473, 1
    %v513 = vsel %vm492, %v511, %v512
    %v514 = vrot.slane %v474, 1
    %v515 = vrot.slane %v475, 1
    %v516 = vsel %vm492, %v514, %v515
    %v533 = vadd.f32 %v460, %v495
    %v534 = vadd.f32 %v461, %v494
    %v535 = vadd.f32 %v462, %v498
    %v536 = vadd.f32 %v463, %v497
    %v537 = vadd.f32 %v464, %v501
    %v538 = vadd.f32 %v465, %v500
    %v539 = vadd.f32 %v466, %v504
    %v540 = vadd.f32 %v467, %v503
    %v541 = vadd.f32 %v468, %v507
    %v542 = vadd.f32 %v469, %v506
    %v543 = vadd.f32 %v470, %v510
    %v544 = vadd.f32 %v471, %v509
    %v545 = vadd.f32 %v472, %v513
    %v546 = vadd.f32 %v473, %v512
    %v547 = vadd.f32 %v474, %v516
    %v548 = vadd.f32 %v475, %v515
    %vm549 = vcmask 1045504
    %v550 = vrot.slane %v460, 2
    %v551 = vrot.slane %v461, 2
    %v552 = vsel %vm549, %v550, %v551
    %v553 = vrot.slane %v462, 2
    %v554 = vrot.slane %v463, 2
    %v555 = vsel %vm549, %v553, %v554
    %v556 = vrot.slane %v464, 2
    %v557 = vrot.slane %v465, 2
    %v558 = vsel %vm549, %v556, %v557
    %v559 = vrot.slane %v466, 2
    %v560 = vrot.slane %v467, 2
    %v561 = vsel %vm549, %v559, %v560
    %v562 = vrot.slane %v468, 2
    %v563 = vrot.slane %v469, 2
    %v564 = vsel %vm549, %v562, %v563
    %v565 = vrot.slane %v470, 2
    %v566 = vrot.slane %v471, 2
    %v567 = vsel %vm549, %v565, %v566
    %v568 = vrot.slane %v472, 2
    %v569 = vrot.slane %v473, 2
    %v570 = vsel %vm549, %v568, %v569
    %v571 = vrot.slane %v474, 2
    %v572 = vrot.slane %v475, 2
    %v573 = vsel %vm549, %v571, %v572
    %v590 = vadd.f32 %v533, %v552
    %v591 = vadd.f32 %v534, %v551
    %v592 = vadd.f32 %v535, %v555
    %v593 = vadd.f32 %v536, %v554
    %v594 = vadd.f32 %v537, %v558
    %v595 = vadd.f32 %v538, %v557
    %v596 = vadd.f32 %v539, %v561
    %v597 = vadd.f32 %v540, %v560
    %v598 = vadd.f32 %v541, %v564
    %v599 = vadd.f32 %v542, %v563
    %v600 = vadd.f32 %v543, %v567
    %v601 = vadd.f32 %v544, %v566
    %v602 = vadd.f32 %v545, %v570
    %v603 = vadd.f32 %v546, %v569
    %v604 = vadd.f32 %v547, %v573
    %v605 = vadd.f32 %v548, %v572
    %v606 = vmul.f32 %v590, 0.11111111
    %v607 = vmul.f32 %v591, 0.11111111
    %v608 = vmul.f32 %v592, 0.11111111
    %v609 = vmul.f32 %v593, 0.11111111
    %v610 = vmul.f32 %v594, 0.11111111
    %v611 = vmul.f32 %v595, 0.11111111
    %v612 = vmul.f32 %v596, 0.11111111
    %v613 = vmul.f32 %v597, 0.11111111
    %v614 = vmul.f32 %v598, 0.11111111
    %v615 = vmul.f32 %v599, 0.11111111
    %v616 = vmul.f32 %v600, 0.11111111
    %v617 = vmul.f32 %v601, 0.11111111
    %v618 = vmul.f32 %v602, 0.11111111
    %v619 = vmul.f32 %v603, 0.11111111
    %v620 = vmul.f32 %v604, 0.11111111
    %v621 = vmul.f32 %v605, 0.11111111
    %vm622 = vcmask 130048
    %623 = vst.msk [vmem:[#allocation6 + $0x1] sm:$0xff] %vm622, %v606
    %vm624 = vcmask 128000
    %625 = vst.msk [vmem:[#allocation6 + $0x9] sm:$0x3f] %vm624, %v607
    %626 = vst.msk [vmem:[#allocation6 + $0x11] sm:$0xff] %vm622, %v608
    %627 = vst.msk [vmem:[#allocation6 + $0x19] sm:$0x3f] %vm624, %v609
    %628 = vst.msk [vmem:[#allocation6 + $0x21] sm:$0xff] %vm622, %v610
    %629 = vst.msk [vmem:[#allocation6 + $0x29] sm:$0x3f] %vm624, %v611
    %630 = vst.msk [vmem:[#allocation6 + $0x31] sm:$0xff] %vm622, %v612
    %631 = vst.msk [vmem:[#allocation6 + $0x39] sm:$0x3f] %vm624, %v613
    %632 = vst.msk [vmem:[#allocation6 + $0x41] sm:$0xff] %vm622, %v614
    %633 = vst.msk [vmem:[#allocation6 + $0x49] sm:$0x3f] %vm624, %v615
    %634 = vst.msk [vmem:[#allocation6 + $0x51] sm:$0xff] %vm622, %v616
    %635 = vst.msk [vmem:[#allocation6 + $0x59] sm:$0x3f] %vm624, %v617
    %636 = vst.msk [vmem:[#allocation6 + $0x61] sm:$0xff] %vm622, %v618
    %637 = vst.msk [vmem:[#allocation6 + $0x69] sm:$0x3f] %vm624, %v619
    %638 = vst.msk [vmem:[#allocation6 + $0x71] sm:$0xff] %vm622, %v620
    %639 = vst.msk [vmem:[#allocation6 + $0x79] sm:$0x3f] %vm624, %v621
    %v640 = vmul.f32 %v460, 2.0
    %v641 = vmul.f32 %v462, 2.0
    %v642 = vmul.f32 %v464, 2.0
    %v643 = vmul.f32 %v466, 2.0
    %v644 = vmul.f32 %v468, 2.0
    %v645 = vmul.f32 %v470, 2.0
    %v646 = vmul.f32 %v472, 2.0
    %v647 = vmul.f32 %v474, 2.0
    %v656 = vrot.slane %v640, 1
    %v657 = vrot.slane %v641, 1
    %v658 = vrot.slane %v642, 1
    %v659 = vrot.slane %v643, 1
    %v660 = vrot.slane %v644, 1
    %v661 = vrot.slane %v645, 1
    %v662 = vrot.slane %v646, 1
    %v663 = vrot.slane %v647, 1
    %v672 = vadd.f32 %v460, %v656
    %v673 = vadd.f32 %v462, %v657
    %v674 = vadd.f32 %v464, %v658
    %v675 = vadd.f32 %v466, %v659
    %v676 = vadd.f32 %v468, %v660
    %v677 = vadd.f32 %v470, %v661
    %v678 = vadd.f32 %v472, %v662
    %v679 = vadd.f32 %v474, %v663
    %v680 = vmul.f32 %v672, 0.11111111
    %v681 = vmul.f32 %v673, 0.11111111
    %v682 = vmul.f32 %v674, 0.11111111
    %v683 = vmul.f32 %v675, 0.11111111
    %v684 = vmul.f32 %v676, 0.11111111
    %v685 = vmul.f32 %v677, 0.11111111
    %v686 = vmul.f32 %v678, 0.11111111
    %v687 = vmul.f32 %v679, 0.11111111
    %vm688 = vcmask 122880
    %689 = vst.msk [vmem:[#allocation6] sm:$0x1] %vm688, %v680
    %690 = vst.msk [vmem:[#allocation6 + $0x10] sm:$0x1] %vm688, %v681
    %691 = vst.msk [vmem:[#allocation6 + $0x20] sm:$0x1] %vm688, %v682
    %692 = vst.msk [vmem:[#allocation6 + $0x30] sm:$0x1] %vm688, %v683
    %693 = vst.msk [vmem:[#allocation6 + $0x40] sm:$0x1] %vm688, %v684
    %694 = vst.msk [vmem:[#allocation6 + $0x50] sm:$0x1] %vm688, %v685
    %695 = vst.msk [vmem:[#allocation6 + $0x60] sm:$0x1] %vm688, %v686
    %696 = vst.msk [vmem:[#allocation6 + $0x70] sm:$0x1] %vm688, %v687
    %v697 = vmul.f32 %v461, 2.0
    %v698 = vmul.f32 %v463, 2.0
    %v699 = vmul.f32 %v465, 2.0
    %v700 = vmul.f32 %v467, 2.0
    %v701 = vmul.f32 %v469, 2.0
    %v702 = vmul.f32 %v471, 2.0
    %v703 = vmul.f32 %v473, 2.0
    %v704 = vmul.f32 %v475, 2.0
    %v713 = vrot.slane %v697, 7
    %v714 = vrot.slane %v698, 7
    %v715 = vrot.slane %v699, 7
    %v716 = vrot.slane %v700, 7
    %v717 = vrot.slane %v701, 7
    %v718 = vrot.slane %v702, 7
    %v719 = vrot.slane %v703, 7
    %v720 = vrot.slane %v704, 7
    %v729 = vadd.f32 %v461, %v713
    %v730 = vadd.f32 %v463, %v714
    %v731 = vadd.f32 %v465, %v715
    %v732 = vadd.f32 %v467, %v716
    %v733 = vadd.f32 %v469, %v717
    %v734 = vadd.f32 %v471, %v718
    %v735 = vadd.f32 %v473, %v719
    %v736 = vadd.f32 %v475, %v720
    %v737 = vmul.f32 %v729, 0.11111111
    %v738 = vmul.f32 %v730, 0.11111111
    %v739 = vmul.f32 %v731, 0.11111111
    %v740 = vmul.f32 %v732, 0.11111111
    %v741 = vmul.f32 %v733, 0.11111111
    %v742 = vmul.f32 %v734, 0.11111111
    %v743 = vmul.f32 %v735, 0.11111111
    %v744 = vmul.f32 %v736, 0.11111111
    %vm745 = vcmask 130055
    %746 = vst.msk [vmem:[#allocation6 + $0x8] sm:$0x80] %vm745, %v737
    %747 = vst.msk [vmem:[#allocation6 + $0x18] sm:$0x80] %vm745, %v738
    %748 = vst.msk [vmem:[#allocation6 + $0x28] sm:$0x80] %vm745, %v739
    %749 = vst.msk [vmem:[#allocation6 + $0x38] sm:$0x80] %vm745, %v740
    %750 = vst.msk [vmem:[#allocation6 + $0x48] sm:$0x80] %vm745, %v741
    %751 = vst.msk [vmem:[#allocation6 + $0x58] sm:$0x80] %vm745, %v742
    %752 = vst.msk [vmem:[#allocation6 + $0x68] sm:$0x80] %vm745, %v743
    %753 = vst.msk [vmem:[#allocation6 + $0x78] sm:$0x80] %vm745, %v744
    // Predicated region
    $region10: #{tpu_custom_call.1} parent=1 // pred_check
      _
    $region11: #{tpu_custom_call.1} parent=1 // pred_check_branch
      %755 = sbr.rel (0) target = $region13
    $region12: #{tpu_custom_call.1} parent=1 // pred_region
      %757 = vsyncadd [#allocation5], 0
      %s758 = sshll.u32 [#allocation6], 4
      %s759 = int_to_ptr.vmem [resolvable:$true] %s758
      %s760 = sshll.u32 %s1, 4
      %s761 = int_to_ptr.hbm [resolvable:$true] %s760
      %766 = dma.vmem_to_hbm [thread:$0]  %s759, 2048, %s761, [#allocation5], 128, 128, 8
    $region13: #{tpu_custom_call.1} parent=1 // pred_fallthru
      _
    // Predicated region
    $region14: #{tpu_custom_call.1} parent=1 // pred_check
      _
    $region15: #{tpu_custom_call.1} parent=1 // pred_check_branch
      %768 = sbr.rel (0) target = $region17
    $region16: #{tpu_custom_call.1} parent=1 // pred_region
      %770 = dma.done [#allocation5], 2048
    $region17: #{tpu_custom_call.1} parent=1 // pred_fallthru
      _
    %771 = vsyncpa [#allocation4], 1
    %772 = vsyncpa [#allocation5], 1

</llo_original>
